<compile_context>
chip_gen: v7x
topology: tpu7x:2x2x1
jax: 0.10.0
libtpu: 0.0.40
codegen_flags: <defaults>
</compile_context>

<pallas_src>
import functools
import math

import jax
import jax.numpy as jnp
from jax.experimental import pallas as pl
from jax.experimental.pallas import tpu as pltpu


def _mha_kernel(x_ref, pe_ref, wqkv_ref, bqkv_ref, wd_ref, bd_ref, o_ref,
                *, tile_b, seq_len, num_heads):
    # Block shapes:
    #   x_ref, pe_ref, o_ref : (tile_m, D) with tile_m = tile_b * seq_len (f32)
    #   wqkv_ref             : (D, 3D)  bf16  (q-columns pre-scaled by 1/sqrt(depth))
    #   bqkv_ref             : (1, 3D)  f32
    #   wd_ref               : (D, D)   bf16
    #   bd_ref               : (1, D)   f32
    d_model = x_ref.shape[-1]
    depth = d_model // num_heads

    # Positional-encoding add in f32, then one cast to bf16 for the MXU.
    xp = (x_ref[...] + pe_ref[...]).astype(jnp.bfloat16)               # (TM, D)

    # Fused Q/K/V projection: a single wide MXU matmul, f32 accumulation.
    qkv = jnp.dot(xp, wqkv_ref[...],
                  preferred_element_type=jnp.float32) + bqkv_ref[...]  # (TM, 3D) f32

    # Gather the (batch-in-tile, head) groups into one leading batch dim so the
    # scores / context matmuls each run as a single batched MXU op instead of
    # tile_b*num_heads tiny (S, depth) matmuls.
    def gather_heads(col0):
        parts = []
        for b in range(tile_b):
            r0 = b * seq_len
            for h in range(num_heads):
                c0 = col0 + h * depth
                parts.append(qkv[r0:r0 + seq_len, c0:c0 + depth])
        return jnp.stack(parts, axis=0)                                 # (G, S, depth) f32

    qh = gather_heads(0 * d_model).astype(jnp.bfloat16)
    kh = gather_heads(1 * d_model).astype(jnp.bfloat16)
    vh = gather_heads(2 * d_model).astype(jnp.bfloat16)

    # Batched attention scores (the 1/sqrt(depth) scale already lives in the
    # q projection weights).
    scores = jnp.einsum('gqd,gkd->gqk', qh, kh,
                        preferred_element_type=jnp.float32)             # (G, S, S) f32

    # Numerically stable softmax in f32; divide -> EUP approximate reciprocal.
    m = jnp.max(scores, axis=-1, keepdims=True)
    e = jnp.exp(scores - m)
    denom = jnp.sum(e, axis=-1, keepdims=True)
    p = (e * pl.reciprocal(denom, approx=True)).astype(jnp.bfloat16)

    ctx = jnp.einsum('gqk,gkd->gqd', p, vh,
                     preferred_element_type=jnp.float32)                # (G, S, depth) f32

    # Re-assemble (TM, D): lane-concat heads per batch element, then row-concat
    # the batch elements of this tile.
    rows = []
    for b in range(tile_b):
        heads = [ctx[b * num_heads + h] for h in range(num_heads)]
        rows.append(jnp.concatenate(heads, axis=-1))                    # (S, D)
    concat = jnp.concatenate(rows, axis=0).astype(jnp.bfloat16)         # (TM, D)

    out = jnp.dot(concat, wd_ref[...],
                  preferred_element_type=jnp.float32) + bd_ref[...]
    o_ref[...] = out.astype(o_ref.dtype)


def _prepare_fused_weights(params, num_heads):
    """Concatenate wq|wk|wv into one (D, 3D) weight, fold 1/sqrt(depth) into
    the q columns, cast matmul weights to bf16 (biases stay f32)."""
    d_model = params["wq"].shape[0]
    depth = d_model // num_heads
    scale = 1.0 / math.sqrt(depth)
    wqkv = jnp.concatenate([params["wq"] * scale, params["wk"], params["wv"]], axis=1)
    bqkv = jnp.concatenate([params["bq"] * scale, params["bk"], params["bv"]], axis=1)
    return (wqkv.astype(jnp.bfloat16), bqkv.astype(jnp.float32),
            params["wd"].astype(jnp.bfloat16), params["bd"].astype(jnp.float32))


def _pick_tile_b(batch, seq_len, max_rows=256):
    """Largest divisor of `batch` whose row slab (tile_b*seq_len) stays <=
    max_rows rows: big-M blocks for the MXU while leaving B/tile_b grid steps
    to shard across TensorCores when the batch is large.  Partial-row blocks
    (tile_b != batch) must be sublane-aligned (rows % 8 == 0)."""
    best = None
    for cand in range(1, batch + 1):
        if batch % cand != 0:
            continue
        rows = cand * seq_len
        if rows > max_rows:
            continue
        if cand != batch and rows % 8 != 0:
            continue
        best = cand
    if best is None:
        best = batch   # single block covering everything (block == full array)
    return best


def sequential_attention_block(x, params, num_heads):
    """x: (B, S, D) float32 -> (B, S, D) float32."""
    B, S, D = x.shape
    assert D % num_heads == 0
    tile_b = _pick_tile_b(B, S)
    tile_m = tile_b * S
    grid = (B // tile_b,)

    # Flatten (B, S) -> M and expand the per-batch PE rows to a matching slab
    # (reproduces the module's pe[:batch]-indexed-by-batch broadcast).
    x_flat = x.reshape(B * S, D)
    pe_rows = jnp.repeat(params["pe"][:B], S, axis=0)                   # (B*S, D)

    wqkv, bqkv, wd, bd = _prepare_fused_weights(params, num_heads)

    kernel = functools.partial(_mha_kernel, tile_b=tile_b, seq_len=S,
                               num_heads=num_heads)
    row_spec = pl.BlockSpec((tile_m, D), lambda i: (i, 0))

    out_flat = pl.pallas_call(
        kernel,
        out_shape=jax.ShapeDtypeStruct((B * S, D), x.dtype),
        grid_spec=pltpu.PrefetchScalarGridSpec(
            num_scalar_prefetch=0,
            grid=grid,
            in_specs=[
                row_spec,                                      # x slab (f32)
                row_spec,                                      # PE slab (f32)
                pl.BlockSpec((D, 3 * D), lambda i: (0, 0)),    # fused qkv weight (bf16)
                pl.BlockSpec((1, 3 * D), lambda i: (0, 0)),    # fused qkv bias  (f32)
                pl.BlockSpec((D, D), lambda i: (0, 0)),        # dense weight    (bf16)
                pl.BlockSpec((1, D), lambda i: (0, 0)),        # dense bias      (f32)
            ],
            out_specs=row_spec,
        ),
        compiler_params=pltpu.CompilerParams(
            dimension_semantics=("parallel",),
        ),
    )(x_flat, pe_rows, wqkv, bqkv, wd, bd)
    return out_flat.reshape(B, S, D)


def make_positional_encoding(d_model, max_len=5000):
    position = jnp.arange(max_len, dtype=jnp.float32)[:, None]          # (L, 1)
    div_term = jnp.exp(jnp.arange(0, d_model, 2, dtype=jnp.float32)
                       * (-math.log(10000.0) / d_model))                # (D/2,)
    pe = jnp.zeros((max_len, d_model), dtype=jnp.float32)
    pe = pe.at[:, 0::2].set(jnp.sin(position * div_term))
    pe = pe.at[:, 1::2].set(jnp.cos(position * div_term))
    return pe                                                           # (L, D)


def init_params(key, d_model):
    # Deterministic synthetic init (PyTorch Linear: y = x @ W.T + b, W:(out,in)).
    # Weights stored transposed as (in, out) so kernels compute x @ W directly.
    ks = jax.random.split(key, 8)
    scale = 1.0 / math.sqrt(d_model)
    def lin(kw, kb):
        w = jax.random.uniform(kw, (d_model, d_model), jnp.float32, -scale, scale)
        b = jax.random.uniform(kb, (1, d_model), jnp.float32, -scale, scale)
        return w, b
    wq, bq = lin(ks[0], ks[1])
    wk, bk = lin(ks[2], ks[3])
    wv, bv = lin(ks[4], ks[5])
    wd, bd = lin(ks[6], ks[7])
    return {"wq": wq, "bq": bq, "wk": wk, "bk": bk,
            "wv": wv, "bv": bv, "wd": wd, "bd": bd,
            "pe": make_positional_encoding(d_model)}


def reference_f32(x, params, num_heads):
    """Pure-f32 JAX mirror of the PyTorch module forward (spec semantics)."""
    B, S, D = x.shape
    depth = D // num_heads
    pe_b = params["pe"][:B][:, None, :]            # (B, 1, D)  -- batch-indexed PE
    xp = x + pe_b
    q = xp @ params["wq"] + params["bq"]
    k = xp @ params["wk"] + params["bk"]
    v = xp @ params["wv"] + params["bv"]
    def split(t):
        return t.reshape(B, S, num_heads, depth).transpose(0, 2, 1, 3)
    q, k, v = split(q), split(k), split(v)
    scores = jnp.einsum("bhqd,bhkd->bhqk", q, k) / jnp.sqrt(jnp.float32(depth))
    attn = jax.nn.softmax(scores, axis=-1)
    out = jnp.einsum("bhqk,bhkd->bhqd", attn, v)
    out = out.transpose(0, 2, 1, 3).reshape(B, S, D)
    return out @ params["wd"] + params["bd"]


def reference_mixed(x, params, num_heads):
    """JAX mirror of the kernel's numerics (bf16 MXU operands, f32 accum)."""
    B, S, D = x.shape
    depth = D // num_heads
    wqkv, bqkv, wd, bd = _prepare_fused_weights(params, num_heads)
    pe_rows = jnp.repeat(params["pe"][:B], S, axis=0)
    xp = (x.reshape(B * S, D) + pe_rows).astype(jnp.bfloat16)
    qkv = jnp.dot(xp, wqkv, preferred_element_type=jnp.float32) + bqkv
    def split(col0):
        t = qkv[:, col0:col0 + D].astype(jnp.bfloat16)
        return t.reshape(B, S, num_heads, depth).transpose(0, 2, 1, 3)
    q, k, v = split(0), split(D), split(2 * D)
    scores = jnp.einsum("bhqd,bhkd->bhqk", q, k, preferred_element_type=jnp.float32)
    attn = jax.nn.softmax(scores, axis=-1).astype(jnp.bfloat16)
    ctx = jnp.einsum("bhqk,bhkd->bhqd", attn, v, preferred_element_type=jnp.float32)
    ctx = ctx.transpose(0, 2, 1, 3).reshape(B * S, D).astype(jnp.bfloat16)
    out = jnp.dot(ctx, wd, preferred_element_type=jnp.float32) + bd
    return out.reshape(B, S, D)


if __name__ == "__main__":
    B, S, D, H = 2, 8, 32, 4

    key = jax.random.PRNGKey(0)
    kx, kp = jax.random.split(key)
    x = jax.random.normal(kx, (B, S, D), dtype=jnp.float32)
    params = init_params(kp, D)

    out = jax.block_until_ready(sequential_attention_block(x, params, num_heads=H))
    assert out.shape == (B, S, D)

    # Tight check against a JAX mirror of the kernel's bf16/f32 mixed precision
    # (only difference: kernel uses an EUP approximate reciprocal in softmax).
    ref_mixed = reference_mixed(x, params, num_heads=H)
    err_mixed = float(jnp.max(jnp.abs(out - ref_mixed)))
    assert err_mixed < 2e-2, f"mixed-precision mirror max err {err_mixed}"

    # Loose check against the full-f32 module semantics (deviation bounded by
    # bf16 MXU operands; accumulation and softmax stay f32).
    ref_f32 = reference_f32(x, params, num_heads=H)
    err_f32 = float(jnp.max(jnp.abs(out - ref_f32)))
    assert err_f32 < 1e-1, f"f32 reference max err {err_f32}"

    print("KERNEL_OK")
</pallas_src>

<mosaic_0001>
module attributes {stable_mosaic.version = 11 : i64} {
  func.func @_mha_kernel(%arg0: i32, %arg1: memref<16x32xf32, #tpu.memory_space<vmem>>, %arg2: memref<16x32xf32, #tpu.memory_space<vmem>>, %arg3: memref<32x96xbf16, #tpu.memory_space<vmem>>, %arg4: memref<1x96xf32, #tpu.memory_space<vmem>>, %arg5: memref<32x32xbf16, #tpu.memory_space<vmem>>, %arg6: memref<1x32xf32, #tpu.memory_space<vmem>>, %arg7: memref<16x32xf32, #tpu.memory_space<vmem>>) attributes {dimension_semantics = [#tpu.dimension_semantics<parallel>], iteration_bounds = array<i64: 1>, scalar_prefetch = 0 : i64, scratch_operands = 0 : i64, tpu.core_type = #tpu.core_type<tc>, window_params = [{transform_indices = @transform_0, window_bounds = array<i64: 16, 32>}, {transform_indices = @transform_1, window_bounds = array<i64: 16, 32>}, {pipeline_mode = #tpu.pipeline_mode<synchronous>, transform_indices = @transform_2, window_bounds = array<i64: 32, 96>}, {pipeline_mode = #tpu.pipeline_mode<synchronous>, transform_indices = @transform_3, window_bounds = array<i64: 1, 96>}, {pipeline_mode = #tpu.pipeline_mode<synchronous>, transform_indices = @transform_4, window_bounds = array<i64: 32, 32>}, {pipeline_mode = #tpu.pipeline_mode<synchronous>, transform_indices = @transform_5, window_bounds = array<i64: 1, 32>}, {transform_indices = @transform_6, window_bounds = array<i64: 16, 32>}]} {
    %c0 = arith.constant 0 : index
    %c0_0 = arith.constant 0 : index
    %0 = vector.load %arg1[%c0, %c0_0] : memref<16x32xf32, #tpu.memory_space<vmem>>, vector<16x32xf32>
    %c0_1 = arith.constant 0 : index
    %c0_2 = arith.constant 0 : index
    %1 = vector.load %arg2[%c0_1, %c0_2] : memref<16x32xf32, #tpu.memory_space<vmem>>, vector<16x32xf32>
    %2 = arith.addf %0, %1 : vector<16x32xf32>
    %3 = arith.truncf %2 : vector<16x32xf32> to vector<16x32xbf16>
    %c0_3 = arith.constant 0 : index
    %c0_4 = arith.constant 0 : index
    %4 = vector.load %arg3[%c0_3, %c0_4] : memref<32x96xbf16, #tpu.memory_space<vmem>>, vector<32x96xbf16>
    %cst = arith.constant dense<0.000000e+00> : vector<16x96xf32>
    %5 = tpu.matmul %3, %4, %cst {dimension_numbers = #tpu.dot_dimension_numbers<[1], [0], [0], [1], [0, 0, 1, 1], [], []>} : vector<16x32xbf16>, vector<32x96xbf16>, vector<16x96xf32> -> vector<16x96xf32>
    %c0_5 = arith.constant 0 : index
    %c0_6 = arith.constant 0 : index
    %6 = vector.load %arg4[%c0_5, %c0_6] : memref<1x96xf32, #tpu.memory_space<vmem>>, vector<1x96xf32>
    %7 = vector.broadcast %6 : vector<1x96xf32> to vector<16x96xf32>
    %8 = arith.addf %5, %7 : vector<16x96xf32>
    %9 = vector.extract_strided_slice %8 {offsets = [0, 0], sizes = [8, 8], strides = [1, 1]} : vector<16x96xf32> to vector<8x8xf32>
    %10 = vector.extract_strided_slice %8 {offsets = [0, 8], sizes = [8, 8], strides = [1, 1]} : vector<16x96xf32> to vector<8x8xf32>
    %11 = vector.extract_strided_slice %8 {offsets = [0, 16], sizes = [8, 8], strides = [1, 1]} : vector<16x96xf32> to vector<8x8xf32>
    %12 = vector.extract_strided_slice %8 {offsets = [0, 24], sizes = [8, 8], strides = [1, 1]} : vector<16x96xf32> to vector<8x8xf32>
    %13 = vector.extract_strided_slice %8 {offsets = [8, 0], sizes = [8, 8], strides = [1, 1]} : vector<16x96xf32> to vector<8x8xf32>
    %14 = vector.extract_strided_slice %8 {offsets = [8, 8], sizes = [8, 8], strides = [1, 1]} : vector<16x96xf32> to vector<8x8xf32>
    %15 = vector.extract_strided_slice %8 {offsets = [8, 16], sizes = [8, 8], strides = [1, 1]} : vector<16x96xf32> to vector<8x8xf32>
    %16 = vector.extract_strided_slice %8 {offsets = [8, 24], sizes = [8, 8], strides = [1, 1]} : vector<16x96xf32> to vector<8x8xf32>
    %17 = vector.shape_cast %9 : vector<8x8xf32> to vector<1x8x8xf32>
    %18 = vector.shape_cast %10 : vector<8x8xf32> to vector<1x8x8xf32>
    %19 = vector.shape_cast %11 : vector<8x8xf32> to vector<1x8x8xf32>
    %20 = vector.shape_cast %12 : vector<8x8xf32> to vector<1x8x8xf32>
    %21 = vector.shape_cast %13 : vector<8x8xf32> to vector<1x8x8xf32>
    %22 = vector.shape_cast %14 : vector<8x8xf32> to vector<1x8x8xf32>
    %23 = vector.shape_cast %15 : vector<8x8xf32> to vector<1x8x8xf32>
    %24 = vector.shape_cast %16 : vector<8x8xf32> to vector<1x8x8xf32>
    %25 = tpu.concatenate %17, %18, %19, %20, %21, %22, %23, %24 in 0 : vector<1x8x8xf32>, vector<1x8x8xf32>, vector<1x8x8xf32>, vector<1x8x8xf32>, vector<1x8x8xf32>, vector<1x8x8xf32>, vector<1x8x8xf32>, vector<1x8x8xf32> -> vector<8x8x8xf32>
    %26 = arith.truncf %25 : vector<8x8x8xf32> to vector<8x8x8xbf16>
    %27 = vector.extract_strided_slice %8 {offsets = [0, 32], sizes = [8, 8], strides = [1, 1]} : vector<16x96xf32> to vector<8x8xf32>
    %28 = vector.extract_strided_slice %8 {offsets = [0, 40], sizes = [8, 8], strides = [1, 1]} : vector<16x96xf32> to vector<8x8xf32>
    %29 = vector.extract_strided_slice %8 {offsets = [0, 48], sizes = [8, 8], strides = [1, 1]} : vector<16x96xf32> to vector<8x8xf32>
    %30 = vector.extract_strided_slice %8 {offsets = [0, 56], sizes = [8, 8], strides = [1, 1]} : vector<16x96xf32> to vector<8x8xf32>
    %31 = vector.extract_strided_slice %8 {offsets = [8, 32], sizes = [8, 8], strides = [1, 1]} : vector<16x96xf32> to vector<8x8xf32>
    %32 = vector.extract_strided_slice %8 {offsets = [8, 40], sizes = [8, 8], strides = [1, 1]} : vector<16x96xf32> to vector<8x8xf32>
    %33 = vector.extract_strided_slice %8 {offsets = [8, 48], sizes = [8, 8], strides = [1, 1]} : vector<16x96xf32> to vector<8x8xf32>
    %34 = vector.extract_strided_slice %8 {offsets = [8, 56], sizes = [8, 8], strides = [1, 1]} : vector<16x96xf32> to vector<8x8xf32>
    %35 = vector.shape_cast %27 : vector<8x8xf32> to vector<1x8x8xf32>
    %36 = vector.shape_cast %28 : vector<8x8xf32> to vector<1x8x8xf32>
    %37 = vector.shape_cast %29 : vector<8x8xf32> to vector<1x8x8xf32>
    %38 = vector.shape_cast %30 : vector<8x8xf32> to vector<1x8x8xf32>
    %39 = vector.shape_cast %31 : vector<8x8xf32> to vector<1x8x8xf32>
    %40 = vector.shape_cast %32 : vector<8x8xf32> to vector<1x8x8xf32>
    %41 = vector.shape_cast %33 : vector<8x8xf32> to vector<1x8x8xf32>
    %42 = vector.shape_cast %34 : vector<8x8xf32> to vector<1x8x8xf32>
    %43 = tpu.concatenate %35, %36, %37, %38, %39, %40, %41, %42 in 0 : vector<1x8x8xf32>, vector<1x8x8xf32>, vector<1x8x8xf32>, vector<1x8x8xf32>, vector<1x8x8xf32>, vector<1x8x8xf32>, vector<1x8x8xf32>, vector<1x8x8xf32> -> vector<8x8x8xf32>
    %44 = arith.truncf %43 : vector<8x8x8xf32> to vector<8x8x8xbf16>
    %45 = vector.extract_strided_slice %8 {offsets = [0, 64], sizes = [8, 8], strides = [1, 1]} : vector<16x96xf32> to vector<8x8xf32>
    %46 = vector.extract_strided_slice %8 {offsets = [0, 72], sizes = [8, 8], strides = [1, 1]} : vector<16x96xf32> to vector<8x8xf32>
    %47 = vector.extract_strided_slice %8 {offsets = [0, 80], sizes = [8, 8], strides = [1, 1]} : vector<16x96xf32> to vector<8x8xf32>
    %48 = vector.extract_strided_slice %8 {offsets = [0, 88], sizes = [8, 8], strides = [1, 1]} : vector<16x96xf32> to vector<8x8xf32>
    %49 = vector.extract_strided_slice %8 {offsets = [8, 64], sizes = [8, 8], strides = [1, 1]} : vector<16x96xf32> to vector<8x8xf32>
    %50 = vector.extract_strided_slice %8 {offsets = [8, 72], sizes = [8, 8], strides = [1, 1]} : vector<16x96xf32> to vector<8x8xf32>
    %51 = vector.extract_strided_slice %8 {offsets = [8, 80], sizes = [8, 8], strides = [1, 1]} : vector<16x96xf32> to vector<8x8xf32>
    %52 = vector.extract_strided_slice %8 {offsets = [8, 88], sizes = [8, 8], strides = [1, 1]} : vector<16x96xf32> to vector<8x8xf32>
    %53 = vector.shape_cast %45 : vector<8x8xf32> to vector<1x8x8xf32>
    %54 = vector.shape_cast %46 : vector<8x8xf32> to vector<1x8x8xf32>
    %55 = vector.shape_cast %47 : vector<8x8xf32> to vector<1x8x8xf32>
    %56 = vector.shape_cast %48 : vector<8x8xf32> to vector<1x8x8xf32>
    %57 = vector.shape_cast %49 : vector<8x8xf32> to vector<1x8x8xf32>
    %58 = vector.shape_cast %50 : vector<8x8xf32> to vector<1x8x8xf32>
    %59 = vector.shape_cast %51 : vector<8x8xf32> to vector<1x8x8xf32>
    %60 = vector.shape_cast %52 : vector<8x8xf32> to vector<1x8x8xf32>
    %61 = tpu.concatenate %53, %54, %55, %56, %57, %58, %59, %60 in 0 : vector<1x8x8xf32>, vector<1x8x8xf32>, vector<1x8x8xf32>, vector<1x8x8xf32>, vector<1x8x8xf32>, vector<1x8x8xf32>, vector<1x8x8xf32>, vector<1x8x8xf32> -> vector<8x8x8xf32>
    %62 = arith.truncf %61 : vector<8x8x8xf32> to vector<8x8x8xbf16>
    "tpu.trace_start"() <{level = 10 : i32, message = "gqd,gkd->gqk"}> : () -> ()
    %cst_7 = arith.constant dense<0.000000e+00> : vector<8x8x8xf32>
    %63 = tpu.matmul %26, %44, %cst_7 {dimension_numbers = #tpu.dot_dimension_numbers<[2], [2], [1], [1], [0, 0, 0, 1, 1, 1], [0], [0]>} : vector<8x8x8xbf16>, vector<8x8x8xbf16>, vector<8x8x8xf32> -> vector<8x8x8xf32>
    "tpu.trace_stop"() : () -> ()
    %cst_8 = arith.constant dense<0xFF800000> : vector<8x8xf32>
    %64 = vector.multi_reduction <maximumf>, %63, %cst_8 [2] : vector<8x8x8xf32> to vector<8x8xf32>
    %65 = vector.shape_cast %64 : vector<8x8xf32> to vector<8x8x1xf32>
    %66 = vector.broadcast %65 : vector<8x8x1xf32> to vector<8x8x8xf32>
    %67 = arith.subf %63, %66 : vector<8x8x8xf32>
    %68 = math.exp %67 : vector<8x8x8xf32>
    %cst_9 = arith.constant dense<0.000000e+00> : vector<8x8xf32>
    %69 = vector.multi_reduction <add>, %68, %cst_9 [2] : vector<8x8x8xf32> to vector<8x8xf32>
    %70 = vector.shape_cast %69 : vector<8x8xf32> to vector<8x8x1xf32>
    %71 = tpu.reciprocal %70 {approx = true} : vector<8x8x1xf32> -> vector<8x8x1xf32>
    %72 = vector.broadcast %71 : vector<8x8x1xf32> to vector<8x8x8xf32>
    %73 = arith.mulf %68, %72 : vector<8x8x8xf32>
    %74 = arith.truncf %73 : vector<8x8x8xf32> to vector<8x8x8xbf16>
    "tpu.trace_start"() <{level = 10 : i32, message = "gqk,gkd->gqd"}> : () -> ()
    %cst_10 = arith.constant dense<0.000000e+00> : vector<8x8x8xf32>
    %75 = tpu.matmul %74, %62, %cst_10 {dimension_numbers = #tpu.dot_dimension_numbers<[2], [1], [1], [2], [0, 0, 0, 1, 1, 2], [0], [0]>} : vector<8x8x8xbf16>, vector<8x8x8xbf16>, vector<8x8x8xf32> -> vector<8x8x8xf32>
    "tpu.trace_stop"() : () -> ()
    %76 = vector.extract_strided_slice %75 {offsets = [0, 0, 0], sizes = [1, 8, 8], strides = [1, 1, 1]} : vector<8x8x8xf32> to vector<1x8x8xf32>
    %77 = vector.shape_cast %76 : vector<1x8x8xf32> to vector<8x8xf32>
    %78 = vector.extract_strided_slice %75 {offsets = [1, 0, 0], sizes = [1, 8, 8], strides = [1, 1, 1]} : vector<8x8x8xf32> to vector<1x8x8xf32>
    %79 = vector.shape_cast %78 : vector<1x8x8xf32> to vector<8x8xf32>
    %80 = vector.extract_strided_slice %75 {offsets = [2, 0, 0], sizes = [1, 8, 8], strides = [1, 1, 1]} : vector<8x8x8xf32> to vector<1x8x8xf32>
    %81 = vector.shape_cast %80 : vector<1x8x8xf32> to vector<8x8xf32>
    %82 = vector.extract_strided_slice %75 {offsets = [3, 0, 0], sizes = [1, 8, 8], strides = [1, 1, 1]} : vector<8x8x8xf32> to vector<1x8x8xf32>
    %83 = vector.shape_cast %82 : vector<1x8x8xf32> to vector<8x8xf32>
    %84 = tpu.concatenate %77, %79, %81, %83 in 1 : vector<8x8xf32>, vector<8x8xf32>, vector<8x8xf32>, vector<8x8xf32> -> vector<8x32xf32>
    %85 = vector.extract_strided_slice %75 {offsets = [4, 0, 0], sizes = [1, 8, 8], strides = [1, 1, 1]} : vector<8x8x8xf32> to vector<1x8x8xf32>
    %86 = vector.shape_cast %85 : vector<1x8x8xf32> to vector<8x8xf32>
    %87 = vector.extract_strided_slice %75 {offsets = [5, 0, 0], sizes = [1, 8, 8], strides = [1, 1, 1]} : vector<8x8x8xf32> to vector<1x8x8xf32>
    %88 = vector.shape_cast %87 : vector<1x8x8xf32> to vector<8x8xf32>
    %89 = vector.extract_strided_slice %75 {offsets = [6, 0, 0], sizes = [1, 8, 8], strides = [1, 1, 1]} : vector<8x8x8xf32> to vector<1x8x8xf32>
    %90 = vector.shape_cast %89 : vector<1x8x8xf32> to vector<8x8xf32>
    %91 = vector.extract_strided_slice %75 {offsets = [7, 0, 0], sizes = [1, 8, 8], strides = [1, 1, 1]} : vector<8x8x8xf32> to vector<1x8x8xf32>
    %92 = vector.shape_cast %91 : vector<1x8x8xf32> to vector<8x8xf32>
    %93 = tpu.concatenate %86, %88, %90, %92 in 1 : vector<8x8xf32>, vector<8x8xf32>, vector<8x8xf32>, vector<8x8xf32> -> vector<8x32xf32>
    %94 = tpu.concatenate %84, %93 in 0 : vector<8x32xf32>, vector<8x32xf32> -> vector<16x32xf32>
    %95 = arith.truncf %94 : vector<16x32xf32> to vector<16x32xbf16>
    %c0_11 = arith.constant 0 : index
    %c0_12 = arith.constant 0 : index
    %96 = vector.load %arg5[%c0_11, %c0_12] : memref<32x32xbf16, #tpu.memory_space<vmem>>, vector<32x32xbf16>
    %cst_13 = arith.constant dense<0.000000e+00> : vector<16x32xf32>
    %97 = tpu.matmul %95, %96, %cst_13 {dimension_numbers = #tpu.dot_dimension_numbers<[1], [0], [0], [1], [0, 0, 1, 1], [], []>} : vector<16x32xbf16>, vector<32x32xbf16>, vector<16x32xf32> -> vector<16x32xf32>
    %c0_14 = arith.constant 0 : index
    %c0_15 = arith.constant 0 : index
    %98 = vector.load %arg6[%c0_14, %c0_15] : memref<1x32xf32, #tpu.memory_space<vmem>>, vector<1x32xf32>
    %99 = vector.broadcast %98 : vector<1x32xf32> to vector<16x32xf32>
    %100 = arith.addf %97, %99 : vector<16x32xf32>
    %c0_16 = arith.constant 0 : index
    %c0_17 = arith.constant 0 : index
    %101 = vector.load %arg7[%c0_16, %c0_17] : memref<16x32xf32, #tpu.memory_space<vmem>>, vector<16x32xf32>
    tpu.vector_store %arg7[%c0_16, %c0_17], %100 {strides = array<i32>} : memref<16x32xf32, #tpu.memory_space<vmem>>, vector<16x32xf32>,
    return
  }
  func.func @transform_0(%arg0: i32) -> (i32, i32) {
    %c0_i32 = arith.constant 0 : i32
    %c0_i32_0 = arith.constant 0 : i32
    return %arg0, %c0_i32 : i32, i32
  }
  func.func @transform_1(%arg0: i32) -> (i32, i32) {
    %c0_i32 = arith.constant 0 : i32
    %c0_i32_0 = arith.constant 0 : i32
    return %arg0, %c0_i32 : i32, i32
  }
  func.func @transform_2(%arg0: i32) -> (i32, i32) {
    %c0_i32 = arith.constant 0 : i32
    %c0_i32_0 = arith.constant 0 : i32
    %c0_i32_1 = arith.constant 0 : i32
    return %c0_i32, %c0_i32_0 : i32, i32
  }
  func.func @transform_3(%arg0: i32) -> (i32, i32) {
    %c0_i32 = arith.constant 0 : i32
    %c0_i32_0 = arith.constant 0 : i32
    %c0_i32_1 = arith.constant 0 : i32
    return %c0_i32, %c0_i32_0 : i32, i32
  }
  func.func @transform_4(%arg0: i32) -> (i32, i32) {
    %c0_i32 = arith.constant 0 : i32
    %c0_i32_0 = arith.constant 0 : i32
    %c0_i32_1 = arith.constant 0 : i32
    return %c0_i32, %c0_i32_0 : i32, i32
  }
  func.func @transform_5(%arg0: i32) -> (i32, i32) {
    %c0_i32 = arith.constant 0 : i32
    %c0_i32_0 = arith.constant 0 : i32
    %c0_i32_1 = arith.constant 0 : i32
    return %c0_i32, %c0_i32_0 : i32, i32
  }
  func.func @transform_6(%arg0: i32) -> (i32, i32) {
    %c0_i32 = arith.constant 0 : i32
    %c0_i32_0 = arith.constant 0 : i32
    return %arg0, %c0_i32 : i32, i32
  }
}

</mosaic_0001>

<llo_original>
// kernel: tpu_custom_call.1
$region0: #{tpu_custom_call.1}
  #allocation0 [shape = 'u32[]', space=smem, size = 0x4, offset = 0x4, fixed_abs, tag = 'smem constant byte address 0x4 - core index']
  #allocation1 [shape = 'u32[144,128]{1,0:T(1,128)}', space=vmem, size = 0x12000, scoped, tag = 'internal scratch']
  %s0 = inlined_call_operand.hbm [shape: f32[16,32], index: 0, kind: input, shape index: {}]
  %s1 = inlined_call_operand.hbm [shape: f32[16,32], index: 1, kind: input, shape index: {}]
  %s2 = inlined_call_operand.hbm [shape: bf16[32,96], index: 2, kind: input, shape index: {}]
  %s3 = inlined_call_operand.vmem [shape: f32[1,96], index: 3, kind: input, shape index: {}]
  %s4 = inlined_call_operand.hbm [shape: bf16[32,32], index: 4, kind: input, shape index: {}]
  %s5 = inlined_call_operand.vmem [shape: f32[1,32], index: 5, kind: input, shape index: {}]
  %s6 = inlined_call_operand.hbm [shape: f32[16,32], index: 6, kind: output, shape index: {}]
  %s7 = sld [smem:[#allocation0]]
  $region50: #{tpu_custom_call.1} parent=0
    _
  %s9 = ssub.s32 1, %s7
  %s10 = scalar_select 0, %s9, %s7
  $region1: #{tpu_custom_call.1} parent=0
    #allocation2 [shape = 'u8[8192]{0}', space=vmem, size = 0x2000, scoped, tag = 'input window, operand 0, single buffered']
    #allocation3 [shape = 's32[1]{0}', space=sflag, size = 0x4, scoped, tag = 'scoped memory for tpu_custom_call.1']
    #allocation4 [shape = 's32[1]{0}', space=sflag, size = 0x4, scoped, tag = 'scoped memory for tpu_custom_call.1']
    #allocation5 [shape = 'u8[8192]{0}', space=vmem, size = 0x2000, scoped, tag = 'input window, operand 1, single buffered']
    #allocation6 [shape = 's32[1]{0}', space=sflag, size = 0x4, scoped, tag = 'scoped memory for tpu_custom_call.1']
    #allocation7 [shape = 'u8[8192]{0}', space=vmem, size = 0x2000, scoped, tag = 'input window, operand 2, single buffered']
    #allocation8 [shape = 'u8[8192]{0}', space=vmem, size = 0x2000, scoped, tag = 'input window, operand 4, single buffered']
    #allocation9 [shape = 's32[1]{0}', space=sflag, size = 0x4, scoped, tag = 'scoped memory for tpu_custom_call.1']
    #allocation10 [shape = 'u8[8192]{0}', space=vmem, size = 0x2000, scoped, tag = 'output window, operand 0, single buffered']
    %11 = vsyncpa [#allocation3], 0
    %12 = vsyncpa [#allocation6], 0
    %13 = vsyncpa [#allocation9], 0
    %14 = vsyncpa [#allocation4], 0
    // Predicated region
    $region2: #{tpu_custom_call.1} parent=1 // pred_check
      _
    $region3: #{tpu_custom_call.1} parent=1 // pred_check_branch
      %16 = sbr.rel (0) target = $region5
    $region4: #{tpu_custom_call.1} parent=1 // pred_region
      %s18 = ssub.s32 256, 256
      %19 = vsyncadd [#allocation3], %s18
      %s20 = sshll.u32 [#allocation2], 4
      %s21 = int_to_ptr.vmem [resolvable:$true] %s20
      %26 = dma.hbm_to_vmem [thread:$0]  %s0, 256, %s21, [#allocation3], 128, 128, 8
    $region5: #{tpu_custom_call.1} parent=1 // pred_fallthru
      _
    // Predicated region
    $region6: #{tpu_custom_call.1} parent=1 // pred_check
      _
    $region7: #{tpu_custom_call.1} parent=1 // pred_check_branch
      %28 = sbr.rel (0) target = $region9
    $region8: #{tpu_custom_call.1} parent=1 // pred_region
      %s30 = ssub.s32 256, 256
      %31 = vsyncadd [#allocation6], %s30
      %s32 = sshll.u32 [#allocation5], 4
      %s33 = int_to_ptr.vmem [resolvable:$true] %s32
      %38 = dma.hbm_to_vmem [thread:$0]  %s1, 256, %s33, [#allocation6], 128, 128, 8
    $region9: #{tpu_custom_call.1} parent=1 // pred_fallthru
      _
    // Predicated region
    $region10: #{tpu_custom_call.1} parent=1 // pred_check
      _
    $region11: #{tpu_custom_call.1} parent=1 // pred_check_branch
      %40 = sbr.rel (0) target = $region13
    $region12: #{tpu_custom_call.1} parent=1 // pred_region
      %s42 = ssub.s32 256, 256
      %43 = vsyncadd [#allocation6], %s42
      %s44 = sshll.u32 [#allocation7], 4
      %s45 = int_to_ptr.vmem [resolvable:$true] %s44
      %50 = dma.hbm_to_vmem [thread:$0]  %s2, 256, %s45, [#allocation6], 64, 64, 4
    $region13: #{tpu_custom_call.1} parent=1 // pred_fallthru
      _
    // Predicated region
    $region14: #{tpu_custom_call.1} parent=1 // pred_check
      _
    $region15: #{tpu_custom_call.1} parent=1 // pred_check_branch
      %52 = sbr.rel (0) target = $region17
    $region16: #{tpu_custom_call.1} parent=1 // pred_region
      _
    $region17: #{tpu_custom_call.1} parent=1 // pred_fallthru
      _
    // Predicated region
    $region18: #{tpu_custom_call.1} parent=1 // pred_check
      _
    $region19: #{tpu_custom_call.1} parent=1 // pred_check_branch
      %54 = sbr.rel (0) target = $region21
    $region20: #{tpu_custom_call.1} parent=1 // pred_region
      %s56 = ssub.s32 256, 256
      %57 = vsyncadd [#allocation9], %s56
      %s58 = sshll.u32 [#allocation8], 4
      %s59 = int_to_ptr.vmem [resolvable:$true] %s58
      %64 = dma.hbm_to_vmem [thread:$0]  %s4, 256, %s59, [#allocation9], 64, 64, 4
    $region21: #{tpu_custom_call.1} parent=1 // pred_fallthru
      _
    // Predicated region
    $region22: #{tpu_custom_call.1} parent=1 // pred_check
      _
    $region23: #{tpu_custom_call.1} parent=1 // pred_check_branch
      %66 = sbr.rel (0) target = $region25
    $region24: #{tpu_custom_call.1} parent=1 // pred_region
      _
    $region25: #{tpu_custom_call.1} parent=1 // pred_fallthru
      _
    // Predicated region
    $region26: #{tpu_custom_call.1} parent=1 // pred_check
      _
    $region27: #{tpu_custom_call.1} parent=1 // pred_check_branch
      %68 = sbr.rel (0) target = $region29
    $region28: #{tpu_custom_call.1} parent=1 // pred_region
      %69 = dma.done [#allocation3], 256
    $region29: #{tpu_custom_call.1} parent=1 // pred_fallthru
      _
    // Predicated region
    $region30: #{tpu_custom_call.1} parent=1 // pred_check
      _
    $region31: #{tpu_custom_call.1} parent=1 // pred_check_branch
      %71 = sbr.rel (0) target = $region33
    $region32: #{tpu_custom_call.1} parent=1 // pred_region
      %72 = dma.done [#allocation6], 256
    $region33: #{tpu_custom_call.1} parent=1 // pred_fallthru
      _
    // Predicated region
    $region34: #{tpu_custom_call.1} parent=1 // pred_check
      _
    $region35: #{tpu_custom_call.1} parent=1 // pred_check_branch
      %74 = sbr.rel (0) target = $region37
    $region36: #{tpu_custom_call.1} parent=1 // pred_region
      %75 = dma.done [#allocation6], 256
    $region37: #{tpu_custom_call.1} parent=1 // pred_fallthru
      _
    // Predicated region
    $region38: #{tpu_custom_call.1} parent=1 // pred_check
      _
    $region39: #{tpu_custom_call.1} parent=1 // pred_check_branch
      %77 = sbr.rel (0) target = $region41
    $region40: #{tpu_custom_call.1} parent=1 // pred_region
      %78 = dma.done [#allocation9], 256
    $region41: #{tpu_custom_call.1} parent=1 // pred_fallthru
      _
    %v80 = vld [vmem:[#allocation2] sm:$0xff]
    %v81 = vld [vmem:[#allocation2 + $0x8] sm:$0xff]
    %v82 = vld [vmem:[#allocation5] sm:$0xff]
    %v83 = vld [vmem:[#allocation5 + $0x8] sm:$0xff]
    %v84 = vadd.f32 %v80, %v82
    %v85 = vadd.f32 %v81, %v83
    %v86 = vpack.c.bf16 %v85, %v84
    %v87 = vld [vmem:[#allocation7] sm:$0xf]
    %v88 = vld [vmem:[#allocation7 + $0x4] sm:$0xf]
    %v89 = vld [vmem:[#allocation7 + $0x8] sm:$0xf]
    %v90 = vld [vmem:[#allocation7 + $0xc] sm:$0xf]
    %v91 = vld [vmem:[%s3] sm:$0x1]
    %v93 = vlaneseq
    %v94 = vshrl.u32 %v93, 7
    %v95 = vsub.s32 0, %v94
    %v96 = vrot.slane %v91, %v95
    %v102 = vunpack.c.l.b16 %v87
    %v103 = vunpack.c.l.b16 %v88
    %v104 = vunpack.c.l.b16 %v89
    %v105 = vunpack.c.l.b16 %v90
    %v106 = vpack.c.b16 %v103, %v102
    %v107 = vpack.c.b16 %v105, %v104
    %vm110 = vcmask 261120
    %v112 = vsel %vm110, %v86, 0
    %114 = vmatprep.subr.bf16.mxu0 0
    %115 = vmatpush1.bf16.msra.mxu0 %v106
    %116 = vmatprep.subr.bf16.mxu0 0
    %117 = vmatpush1.bf16.msra.mxu0 %v107
    %118 = vmatprep.subr.bf16.mxu0 0
    %119 = vmatpush1.bf16.msra.mxu0 0
    %120 = vmatprep.subr.bf16.mxu0 0
    %121 = vmatpush1.bf16.msra.mxu0 0
    %122 = vmatprep.subr.bf16.mxu0 0
    %123 = vmatpush1.bf16.msra.mxu0 0
    %124 = vmatprep.subr.bf16.mxu0 0
    %125 = vmatpush1.bf16.msra.mxu0 0
    %126 = vmatprep.subr.bf16.mxu0 0
    %127 = vmatpush1.bf16.msra.mxu0 0
    %128 = vmatprep.subr.bf16.mxu0 0
    %129 = vmatpush1.bf16.msra.mxu0 0
    %130 = vmatprep.subr.bf16.mxu0 0
    %131 = vmatpush1.bf16.msra.mxu0 0
    %132 = vmatprep.subr.bf16.mxu0 0
    %133 = vmatpush1.bf16.msra.mxu0 0
    %134 = vmatprep.subr.bf16.mxu0 0
    %135 = vmatpush1.bf16.msra.mxu0 0
    %136 = vmatprep.subr.bf16.mxu0 0
    %137 = vmatpush1.bf16.msra.mxu0 0
    %138 = vmatprep.subr.bf16.mxu0 0
    %139 = vmatpush1.bf16.msra.mxu0 0
    %140 = vmatprep.subr.bf16.mxu0 0
    %141 = vmatpush1.bf16.msra.mxu0 0
    %142 = vmatprep.subr.bf16.mxu0 0
    %143 = vmatpush1.bf16.msra.mxu0 0
    %144 = vmatprep.subr.bf16.mxu0 0
    %145 = vmatpush1.bf16.msra.mxu0 0
    %146 = vmatprep.mubr.bf16.mxu0 0
    %147 = vmatmul.mubr.bf16.gmra.mrb[0].mxu0 %v112
    %v148 = vpop.f32.mrb[0].mxu0
    %v149 = vadd.f32 %v96, %v148
    %v150 = vpop.f32.mrb[0].mxu0
    %v151 = vpop.f32.mrb[0].mxu0
    %v152 = vadd.f32 %v96, %v151
    %v153 = vpop.f32.mrb[0].mxu0
    %154 = vdwg.mxu0
    %156 = vrot.lane.b32.xlu0 %v149, 120
    %v157 = vpop.permute.xlu0 %156
    %159 = vrot.lane.b32.xlu0 %v149, 112
    %v160 = vpop.permute.xlu0 %159
    %162 = vrot.lane.b32.xlu0 %v149, 104
    %v163 = vpop.permute.xlu0 %162
    %166 = vrot.lane.b32.xlu0 %v152, 120
    %v167 = vpop.permute.xlu0 %166
    %169 = vrot.lane.b32.xlu0 %v152, 112
    %v170 = vpop.permute.xlu0 %169
    %172 = vrot.lane.b32.xlu0 %v152, 104
    %v173 = vpop.permute.xlu0 %172
    %v175 = vpack.c.bf16 %v149, %v149
    %v176 = vpack.c.bf16 %v157, %v157
    %v177 = vpack.c.bf16 %v160, %v160
    %v178 = vpack.c.bf16 %v163, %v163
    %v179 = vpack.c.bf16 %v152, %v152
    %v180 = vpack.c.bf16 %v167, %v167
    %v181 = vpack.c.bf16 %v170, %v170
    %v182 = vpack.c.bf16 %v173, %v173
    %184 = vrot.lane.b32.xlu0 %v175, 96
    %v185 = vpop.permute.xlu0 %184
    %vm186 = vcmask 64512
    %v188 = vsel %vm186, %v175, 0
    %v191 = vsel %vm186, %v185, 0
    %193 = vmatprep.subr.bf16.mxu0 0
    %194 = vmatpush1.bf16.xpose.msra.mxu0 %v191
    %195 = vmatprep.subr.bf16.mxu0 0
    %196 = vmatpush1.bf16.xpose.msra.mxu0 0
    %197 = vmatprep.subr.bf16.mxu0 0
    %198 = vmatpush1.bf16.xpose.msra.mxu0 0
    %199 = vmatprep.subr.bf16.mxu0 0
    %200 = vmatpush1.bf16.xpose.msra.mxu0 0
    %201 = vmatprep.subr.bf16.mxu0 0
    %202 = vmatpush1.bf16.xpose.msra.mxu0 0
    %203 = vmatprep.subr.bf16.mxu0 0
    %204 = vmatpush1.bf16.xpose.msra.mxu0 0
    %205 = vmatprep.subr.bf16.mxu0 0
    %206 = vmatpush1.bf16.xpose.msra.mxu0 0
    %207 = vmatprep.subr.bf16.mxu0 0
    %208 = vmatpush1.bf16.xpose.msra.mxu0 0
    %209 = vmatprep.subr.bf16.mxu0 0
    %210 = vmatpush1.bf16.xpose.msra.mxu0 0
    %211 = vmatprep.subr.bf16.mxu0 0
    %212 = vmatpush1.bf16.xpose.msra.mxu0 0
    %213 = vmatprep.subr.bf16.mxu0 0
    %214 = vmatpush1.bf16.xpose.msra.mxu0 0
    %215 = vmatprep.subr.bf16.mxu0 0
    %216 = vmatpush1.bf16.xpose.msra.mxu0 0
    %217 = vmatprep.subr.bf16.mxu0 0
    %218 = vmatpush1.bf16.xpose.msra.mxu0 0
    %219 = vmatprep.subr.bf16.mxu0 0
    %220 = vmatpush1.bf16.xpose.msra.mxu0 0
    %221 = vmatprep.subr.bf16.mxu0 0
    %222 = vmatpush1.bf16.xpose.msra.mxu0 0
    %223 = vmatprep.subr.bf16.mxu0 0
    %224 = vmatpush1.bf16.xpose.msra.mxu0 0
    %225 = vmatprep.mubr.bf16.mxu0 0
    %226 = vmatmul.mubr.bf16.gmra.mrb[0].mxu0 %v188
    %v227 = vpop.f32.mrb[0].mxu0
    %v228 = vadd.f32 0.0, %v227
    %v229 = vpop.f32.mrb[0].mxu0
    %v230 = vpop.f32.mrb[0].mxu0
    %v231 = vpop.f32.mrb[0].mxu0
    %232 = vdwg.mxu0
    %234 = vrot.lane.b32.xlu0 %v176, 96
    %v235 = vpop.permute.xlu0 %234
    %v237 = vsel %vm186, %v176, 0
    %v240 = vsel %vm186, %v235, 0
    %242 = vmatprep.subr.bf16.mxu0 0
    %243 = vmatpush1.bf16.xpose.msra.mxu0 %v240
    %244 = vmatprep.subr.bf16.mxu0 0
    %245 = vmatpush1.bf16.xpose.msra.mxu0 0
    %246 = vmatprep.subr.bf16.mxu0 0
    %247 = vmatpush1.bf16.xpose.msra.mxu0 0
    %248 = vmatprep.subr.bf16.mxu0 0
    %249 = vmatpush1.bf16.xpose.msra.mxu0 0
    %250 = vmatprep.subr.bf16.mxu0 0
    %251 = vmatpush1.bf16.xpose.msra.mxu0 0
    %252 = vmatprep.subr.bf16.mxu0 0
    %253 = vmatpush1.bf16.xpose.msra.mxu0 0
    %254 = vmatprep.subr.bf16.mxu0 0
    %255 = vmatpush1.bf16.xpose.msra.mxu0 0
    %256 = vmatprep.subr.bf16.mxu0 0
    %257 = vmatpush1.bf16.xpose.msra.mxu0 0
    %258 = vmatprep.subr.bf16.mxu0 0
    %259 = vmatpush1.bf16.xpose.msra.mxu0 0
    %260 = vmatprep.subr.bf16.mxu0 0
    %261 = vmatpush1.bf16.xpose.msra.mxu0 0
    %262 = vmatprep.subr.bf16.mxu0 0
    %263 = vmatpush1.bf16.xpose.msra.mxu0 0
    %264 = vmatprep.subr.bf16.mxu0 0
    %265 = vmatpush1.bf16.xpose.msra.mxu0 0
    %266 = vmatprep.subr.bf16.mxu0 0
    %267 = vmatpush1.bf16.xpose.msra.mxu0 0
    %268 = vmatprep.subr.bf16.mxu0 0
    %269 = vmatpush1.bf16.xpose.msra.mxu0 0
    %270 = vmatprep.subr.bf16.mxu0 0
    %271 = vmatpush1.bf16.xpose.msra.mxu0 0
    %272 = vmatprep.subr.bf16.mxu0 0
    %273 = vmatpush1.bf16.xpose.msra.mxu0 0
    %274 = vmatprep.mubr.bf16.mxu0 0
    %275 = vmatmul.mubr.bf16.gmra.mrb[0].mxu0 %v237
    %v276 = vpop.f32.mrb[0].mxu0
    %v277 = vadd.f32 0.0, %v276
    %v278 = vpop.f32.mrb[0].mxu0
    %v279 = vpop.f32.mrb[0].mxu0
    %v280 = vpop.f32.mrb[0].mxu0
    %281 = vdwg.mxu0
    %283 = vrot.lane.b32.xlu0 %v177, 96
    %v284 = vpop.permute.xlu0 %283
    %v286 = vsel %vm186, %v177, 0
    %v289 = vsel %vm186, %v284, 0
    %291 = vmatprep.subr.bf16.mxu0 0
    %292 = vmatpush1.bf16.xpose.msra.mxu0 %v289
    %293 = vmatprep.subr.bf16.mxu0 0
    %294 = vmatpush1.bf16.xpose.msra.mxu0 0
    %295 = vmatprep.subr.bf16.mxu0 0
    %296 = vmatpush1.bf16.xpose.msra.mxu0 0
    %297 = vmatprep.subr.bf16.mxu0 0
    %298 = vmatpush1.bf16.xpose.msra.mxu0 0
    %299 = vmatprep.subr.bf16.mxu0 0
    %300 = vmatpush1.bf16.xpose.msra.mxu0 0
    %301 = vmatprep.subr.bf16.mxu0 0
    %302 = vmatpush1.bf16.xpose.msra.mxu0 0
    %303 = vmatprep.subr.bf16.mxu0 0
    %304 = vmatpush1.bf16.xpose.msra.mxu0 0
    %305 = vmatprep.subr.bf16.mxu0 0
    %306 = vmatpush1.bf16.xpose.msra.mxu0 0
    %307 = vmatprep.subr.bf16.mxu0 0
    %308 = vmatpush1.bf16.xpose.msra.mxu0 0
    %309 = vmatprep.subr.bf16.mxu0 0
    %310 = vmatpush1.bf16.xpose.msra.mxu0 0
    %311 = vmatprep.subr.bf16.mxu0 0
    %312 = vmatpush1.bf16.xpose.msra.mxu0 0
    %313 = vmatprep.subr.bf16.mxu0 0
    %314 = vmatpush1.bf16.xpose.msra.mxu0 0
    %315 = vmatprep.subr.bf16.mxu0 0
    %316 = vmatpush1.bf16.xpose.msra.mxu0 0
    %317 = vmatprep.subr.bf16.mxu0 0
    %318 = vmatpush1.bf16.xpose.msra.mxu0 0
    %319 = vmatprep.subr.bf16.mxu0 0
    %320 = vmatpush1.bf16.xpose.msra.mxu0 0
    %321 = vmatprep.subr.bf16.mxu0 0
    %322 = vmatpush1.bf16.xpose.msra.mxu0 0
    %323 = vmatprep.mubr.bf16.mxu0 0
    %324 = vmatmul.mubr.bf16.gmra.mrb[0].mxu0 %v286
    %v325 = vpop.f32.mrb[0].mxu0
    %v326 = vadd.f32 0.0, %v325
    %v327 = vpop.f32.mrb[0].mxu0
    %v328 = vpop.f32.mrb[0].mxu0
    %v329 = vpop.f32.mrb[0].mxu0
    %330 = vdwg.mxu0
    %332 = vrot.lane.b32.xlu0 %v178, 96
    %v333 = vpop.permute.xlu0 %332
    %v335 = vsel %vm186, %v178, 0
    %v338 = vsel %vm186, %v333, 0
    %340 = vmatprep.subr.bf16.mxu0 0
    %341 = vmatpush1.bf16.xpose.msra.mxu0 %v338
    %342 = vmatprep.subr.bf16.mxu0 0
    %343 = vmatpush1.bf16.xpose.msra.mxu0 0
    %344 = vmatprep.subr.bf16.mxu0 0
    %345 = vmatpush1.bf16.xpose.msra.mxu0 0
    %346 = vmatprep.subr.bf16.mxu0 0
    %347 = vmatpush1.bf16.xpose.msra.mxu0 0
    %348 = vmatprep.subr.bf16.mxu0 0
    %349 = vmatpush1.bf16.xpose.msra.mxu0 0
    %350 = vmatprep.subr.bf16.mxu0 0
    %351 = vmatpush1.bf16.xpose.msra.mxu0 0
    %352 = vmatprep.subr.bf16.mxu0 0
    %353 = vmatpush1.bf16.xpose.msra.mxu0 0
    %354 = vmatprep.subr.bf16.mxu0 0
    %355 = vmatpush1.bf16.xpose.msra.mxu0 0
    %356 = vmatprep.subr.bf16.mxu0 0
    %357 = vmatpush1.bf16.xpose.msra.mxu0 0
    %358 = vmatprep.subr.bf16.mxu0 0
    %359 = vmatpush1.bf16.xpose.msra.mxu0 0
    %360 = vmatprep.subr.bf16.mxu0 0
    %361 = vmatpush1.bf16.xpose.msra.mxu0 0
    %362 = vmatprep.subr.bf16.mxu0 0
    %363 = vmatpush1.bf16.xpose.msra.mxu0 0
    %364 = vmatprep.subr.bf16.mxu0 0
    %365 = vmatpush1.bf16.xpose.msra.mxu0 0
    %366 = vmatprep.subr.bf16.mxu0 0
    %367 = vmatpush1.bf16.xpose.msra.mxu0 0
    %368 = vmatprep.subr.bf16.mxu0 0
    %369 = vmatpush1.bf16.xpose.msra.mxu0 0
    %370 = vmatprep.subr.bf16.mxu0 0
    %371 = vmatpush1.bf16.xpose.msra.mxu0 0
    %372 = vmatprep.mubr.bf16.mxu0 0
    %373 = vmatmul.mubr.bf16.gmra.mrb[0].mxu0 %v335
    %v374 = vpop.f32.mrb[0].mxu0
    %v375 = vadd.f32 0.0, %v374
    %v376 = vpop.f32.mrb[0].mxu0
    %v377 = vpop.f32.mrb[0].mxu0
    %v378 = vpop.f32.mrb[0].mxu0
    %379 = vdwg.mxu0
    %381 = vrot.lane.b32.xlu0 %v179, 96
    %v382 = vpop.permute.xlu0 %381
    %v384 = vsel %vm186, %v179, 0
    %v387 = vsel %vm186, %v382, 0
    %389 = vmatprep.subr.bf16.mxu0 0
    %390 = vmatpush1.bf16.xpose.msra.mxu0 %v387
    %391 = vmatprep.subr.bf16.mxu0 0
    %392 = vmatpush1.bf16.xpose.msra.mxu0 0
    %393 = vmatprep.subr.bf16.mxu0 0
    %394 = vmatpush1.bf16.xpose.msra.mxu0 0
    %395 = vmatprep.subr.bf16.mxu0 0
    %396 = vmatpush1.bf16.xpose.msra.mxu0 0
    %397 = vmatprep.subr.bf16.mxu0 0
    %398 = vmatpush1.bf16.xpose.msra.mxu0 0
    %399 = vmatprep.subr.bf16.mxu0 0
    %400 = vmatpush1.bf16.xpose.msra.mxu0 0
    %401 = vmatprep.subr.bf16.mxu0 0
    %402 = vmatpush1.bf16.xpose.msra.mxu0 0
    %403 = vmatprep.subr.bf16.mxu0 0
    %404 = vmatpush1.bf16.xpose.msra.mxu0 0
    %405 = vmatprep.subr.bf16.mxu0 0
    %406 = vmatpush1.bf16.xpose.msra.mxu0 0
    %407 = vmatprep.subr.bf16.mxu0 0
    %408 = vmatpush1.bf16.xpose.msra.mxu0 0
    %409 = vmatprep.subr.bf16.mxu0 0
    %410 = vmatpush1.bf16.xpose.msra.mxu0 0
    %411 = vmatprep.subr.bf16.mxu0 0
    %412 = vmatpush1.bf16.xpose.msra.mxu0 0
    %413 = vmatprep.subr.bf16.mxu0 0
    %414 = vmatpush1.bf16.xpose.msra.mxu0 0
    %415 = vmatprep.subr.bf16.mxu0 0
    %416 = vmatpush1.bf16.xpose.msra.mxu0 0
    %417 = vmatprep.subr.bf16.mxu0 0
    %418 = vmatpush1.bf16.xpose.msra.mxu0 0
    %419 = vmatprep.subr.bf16.mxu0 0
    %420 = vmatpush1.bf16.xpose.msra.mxu0 0
    %421 = vmatprep.mubr.bf16.mxu0 0
    %422 = vmatmul.mubr.bf16.gmra.mrb[0].mxu0 %v384
    %v423 = vpop.f32.mrb[0].mxu0
    %v424 = vadd.f32 0.0, %v423
    %v425 = vpop.f32.mrb[0].mxu0
    %v426 = vpop.f32.mrb[0].mxu0
    %v427 = vpop.f32.mrb[0].mxu0
    %428 = vdwg.mxu0
    %430 = vrot.lane.b32.xlu0 %v180, 96
    %v431 = vpop.permute.xlu0 %430
    %v433 = vsel %vm186, %v180, 0
    %v436 = vsel %vm186, %v431, 0
    %438 = vmatprep.subr.bf16.mxu0 0
    %439 = vmatpush1.bf16.xpose.msra.mxu0 %v436
    %440 = vmatprep.subr.bf16.mxu0 0
    %441 = vmatpush1.bf16.xpose.msra.mxu0 0
    %442 = vmatprep.subr.bf16.mxu0 0
    %443 = vmatpush1.bf16.xpose.msra.mxu0 0
    %444 = vmatprep.subr.bf16.mxu0 0
    %445 = vmatpush1.bf16.xpose.msra.mxu0 0
    %446 = vmatprep.subr.bf16.mxu0 0
    %447 = vmatpush1.bf16.xpose.msra.mxu0 0
    %448 = vmatprep.subr.bf16.mxu0 0
    %449 = vmatpush1.bf16.xpose.msra.mxu0 0
    %450 = vmatprep.subr.bf16.mxu0 0
    %451 = vmatpush1.bf16.xpose.msra.mxu0 0
    %452 = vmatprep.subr.bf16.mxu0 0
    %453 = vmatpush1.bf16.xpose.msra.mxu0 0
    %454 = vmatprep.subr.bf16.mxu0 0
    %455 = vmatpush1.bf16.xpose.msra.mxu0 0
    %456 = vmatprep.subr.bf16.mxu0 0
    %457 = vmatpush1.bf16.xpose.msra.mxu0 0
    %458 = vmatprep.subr.bf16.mxu0 0
    %459 = vmatpush1.bf16.xpose.msra.mxu0 0
    %460 = vmatprep.subr.bf16.mxu0 0
    %461 = vmatpush1.bf16.xpose.msra.mxu0 0
    %462 = vmatprep.subr.bf16.mxu0 0
    %463 = vmatpush1.bf16.xpose.msra.mxu0 0
    %464 = vmatprep.subr.bf16.mxu0 0
    %465 = vmatpush1.bf16.xpose.msra.mxu0 0
    %466 = vmatprep.subr.bf16.mxu0 0
    %467 = vmatpush1.bf16.xpose.msra.mxu0 0
    %468 = vmatprep.subr.bf16.mxu0 0
    %469 = vmatpush1.bf16.xpose.msra.mxu0 0
    %470 = vmatprep.mubr.bf16.mxu0 0
    %471 = vmatmul.mubr.bf16.gmra.mrb[0].mxu0 %v433
    %v472 = vpop.f32.mrb[0].mxu0
    %v473 = vadd.f32 0.0, %v472
    %v474 = vpop.f32.mrb[0].mxu0
    %v475 = vpop.f32.mrb[0].mxu0
    %v476 = vpop.f32.mrb[0].mxu0
    %477 = vdwg.mxu0
    %479 = vrot.lane.b32.xlu0 %v181, 96
    %v480 = vpop.permute.xlu0 %479
    %v482 = vsel %vm186, %v181, 0
    %v485 = vsel %vm186, %v480, 0
    %487 = vmatprep.subr.bf16.mxu0 0
    %488 = vmatpush1.bf16.xpose.msra.mxu0 %v485
    %489 = vmatprep.subr.bf16.mxu0 0
    %490 = vmatpush1.bf16.xpose.msra.mxu0 0
    %491 = vmatprep.subr.bf16.mxu0 0
    %492 = vmatpush1.bf16.xpose.msra.mxu0 0
    %493 = vmatprep.subr.bf16.mxu0 0
    %494 = vmatpush1.bf16.xpose.msra.mxu0 0
    %495 = vmatprep.subr.bf16.mxu0 0
    %496 = vmatpush1.bf16.xpose.msra.mxu0 0
    %497 = vmatprep.subr.bf16.mxu0 0
    %498 = vmatpush1.bf16.xpose.msra.mxu0 0
    %499 = vmatprep.subr.bf16.mxu0 0
    %500 = vmatpush1.bf16.xpose.msra.mxu0 0
    %501 = vmatprep.subr.bf16.mxu0 0
    %502 = vmatpush1.bf16.xpose.msra.mxu0 0
    %503 = vmatprep.subr.bf16.mxu0 0
    %504 = vmatpush1.bf16.xpose.msra.mxu0 0
    %505 = vmatprep.subr.bf16.mxu0 0
    %506 = vmatpush1.bf16.xpose.msra.mxu0 0
    %507 = vmatprep.subr.bf16.mxu0 0
    %508 = vmatpush1.bf16.xpose.msra.mxu0 0
    %509 = vmatprep.subr.bf16.mxu0 0
    %510 = vmatpush1.bf16.xpose.msra.mxu0 0
    %511 = vmatprep.subr.bf16.mxu0 0
    %512 = vmatpush1.bf16.xpose.msra.mxu0 0
    %513 = vmatprep.subr.bf16.mxu0 0
    %514 = vmatpush1.bf16.xpose.msra.mxu0 0
    %515 = vmatprep.subr.bf16.mxu0 0
    %516 = vmatpush1.bf16.xpose.msra.mxu0 0
    %517 = vmatprep.subr.bf16.mxu0 0
    %518 = vmatpush1.bf16.xpose.msra.mxu0 0
    %519 = vmatprep.mubr.bf16.mxu0 0
    %520 = vmatmul.mubr.bf16.gmra.mrb[0].mxu0 %v482
    %v521 = vpop.f32.mrb[0].mxu0
    %v522 = vadd.f32 0.0, %v521
    %v523 = vpop.f32.mrb[0].mxu0
    %v524 = vpop.f32.mrb[0].mxu0
    %v525 = vpop.f32.mrb[0].mxu0
    %526 = vdwg.mxu0
    %528 = vrot.lane.b32.xlu0 %v182, 96
    %v529 = vpop.permute.xlu0 %528
    %v531 = vsel %vm186, %v182, 0
    %v534 = vsel %vm186, %v529, 0
    %536 = vmatprep.subr.bf16.mxu0 0
    %537 = vmatpush1.bf16.xpose.msra.mxu0 %v534
    %538 = vmatprep.subr.bf16.mxu0 0
    %539 = vmatpush1.bf16.xpose.msra.mxu0 0
    %540 = vmatprep.subr.bf16.mxu0 0
    %541 = vmatpush1.bf16.xpose.msra.mxu0 0
    %542 = vmatprep.subr.bf16.mxu0 0
    %543 = vmatpush1.bf16.xpose.msra.mxu0 0
    %544 = vmatprep.subr.bf16.mxu0 0
    %545 = vmatpush1.bf16.xpose.msra.mxu0 0
    %546 = vmatprep.subr.bf16.mxu0 0
    %547 = vmatpush1.bf16.xpose.msra.mxu0 0
    %548 = vmatprep.subr.bf16.mxu0 0
    %549 = vmatpush1.bf16.xpose.msra.mxu0 0
    %550 = vmatprep.subr.bf16.mxu0 0
    %551 = vmatpush1.bf16.xpose.msra.mxu0 0
    %552 = vmatprep.subr.bf16.mxu0 0
    %553 = vmatpush1.bf16.xpose.msra.mxu0 0
    %554 = vmatprep.subr.bf16.mxu0 0
    %555 = vmatpush1.bf16.xpose.msra.mxu0 0
    %556 = vmatprep.subr.bf16.mxu0 0
    %557 = vmatpush1.bf16.xpose.msra.mxu0 0
    %558 = vmatprep.subr.bf16.mxu0 0
    %559 = vmatpush1.bf16.xpose.msra.mxu0 0
    %560 = vmatprep.subr.bf16.mxu0 0
    %561 = vmatpush1.bf16.xpose.msra.mxu0 0
    %562 = vmatprep.subr.bf16.mxu0 0
    %563 = vmatpush1.bf16.xpose.msra.mxu0 0
    %564 = vmatprep.subr.bf16.mxu0 0
    %565 = vmatpush1.bf16.xpose.msra.mxu0 0
    %566 = vmatprep.subr.bf16.mxu0 0
    %567 = vmatpush1.bf16.xpose.msra.mxu0 0
    %568 = vmatprep.mubr.bf16.mxu0 0
    %569 = vmatmul.mubr.bf16.gmra.mrb[0].mxu0 %v531
    %v570 = vpop.f32.mrb[0].mxu0
    %v571 = vadd.f32 0.0, %v570
    %v572 = vpop.f32.mrb[0].mxu0
    %v573 = vpop.f32.mrb[0].mxu0
    %v574 = vpop.f32.mrb[0].mxu0
    %575 = vdwg.mxu0
    %v576 = vsel %vm186, %v228, -inf
    %577 = vmax.xlane.f32.xlu0 %v576
    %v578 = vpop.xlane.xlu0 %577
    %v579 = vsel %vm186, %v277, -inf
    %580 = vmax.xlane.f32.xlu0 %v579
    %v581 = vpop.xlane.xlu0 %580
    %v582 = vsel %vm186, %v326, -inf
    %583 = vmax.xlane.f32.xlu0 %v582
    %v584 = vpop.xlane.xlu0 %583
    %v585 = vsel %vm186, %v375, -inf
    %586 = vmax.xlane.f32.xlu0 %v585
    %v587 = vpop.xlane.xlu0 %586
    %v588 = vsel %vm186, %v424, -inf
    %589 = vmax.xlane.f32.xlu0 %v588
    %v590 = vpop.xlane.xlu0 %589
    %v591 = vsel %vm186, %v473, -inf
    %592 = vmax.xlane.f32.xlu0 %v591
    %v593 = vpop.xlane.xlu0 %592
    %v594 = vsel %vm186, %v522, -inf
    %595 = vmax.xlane.f32.xlu0 %v594
    %v596 = vpop.xlane.xlu0 %595
    %v597 = vsel %vm186, %v571, -inf
    %598 = vmax.xlane.f32.xlu0 %v597
    %v599 = vpop.xlane.xlu0 %598
    %v600 = vsub.f32 %v228, %v578
    %v601 = vsub.f32 %v277, %v581
    %v602 = vsub.f32 %v326, %v584
    %v603 = vsub.f32 %v375, %v587
    %v604 = vsub.f32 %v424, %v590
    %v605 = vsub.f32 %v473, %v593
    %v606 = vsub.f32 %v522, %v596
    %v607 = vsub.f32 %v571, %v599
    %v608 = vmul.f32 %v600, 1.442695
    %v609 = vpow.pop %v608
    %v610 = vmul.f32 %v601, 1.442695
    %v611 = vpow.pop %v610
    %v612 = vmul.f32 %v602, 1.442695
    %v613 = vpow.pop %v612
    %v614 = vmul.f32 %v603, 1.442695
    %v615 = vpow.pop %v614
    %v616 = vmul.f32 %v604, 1.442695
    %v617 = vpow.pop %v616
    %v618 = vmul.f32 %v605, 1.442695
    %v619 = vpow.pop %v618
    %v620 = vmul.f32 %v606, 1.442695
    %v621 = vpow.pop %v620
    %v622 = vmul.f32 %v607, 1.442695
    %v623 = vpow.pop %v622
    %v624 = vsel %vm186, %v609, 0.0
    %625 = vadd.xlane.f32.xlu0 %v624
    %v626 = vpop.xlane.xlu0 %625
    %v627 = vsel %vm186, %v611, 0.0
    %628 = vadd.xlane.f32.xlu0 %v627
    %v629 = vpop.xlane.xlu0 %628
    %v630 = vsel %vm186, %v613, 0.0
    %631 = vadd.xlane.f32.xlu0 %v630
    %v632 = vpop.xlane.xlu0 %631
    %v633 = vsel %vm186, %v615, 0.0
    %634 = vadd.xlane.f32.xlu0 %v633
    %v635 = vpop.xlane.xlu0 %634
    %v636 = vsel %vm186, %v617, 0.0
    %637 = vadd.xlane.f32.xlu0 %v636
    %v638 = vpop.xlane.xlu0 %637
    %v639 = vsel %vm186, %v619, 0.0
    %640 = vadd.xlane.f32.xlu0 %v639
    %v641 = vpop.xlane.xlu0 %640
    %v642 = vsel %vm186, %v621, 0.0
    %643 = vadd.xlane.f32.xlu0 %v642
    %v644 = vpop.xlane.xlu0 %643
    %v645 = vsel %vm186, %v623, 0.0
    %646 = vadd.xlane.f32.xlu0 %v645
    %v647 = vpop.xlane.xlu0 %646
    %v648 = vrcp.pop %v626
    %v649 = vrcp.pop %v629
    %v650 = vrcp.pop %v632
    %v651 = vrcp.pop %v635
    %v652 = vrcp.pop %v638
    %v653 = vrcp.pop %v641
    %v654 = vrcp.pop %v644
    %v655 = vrcp.pop %v647
    %v656 = vmul.f32 %v609, %v648
    %v657 = vmul.f32 %v611, %v649
    %v658 = vmul.f32 %v613, %v650
    %v659 = vmul.f32 %v615, %v651
    %v660 = vmul.f32 %v617, %v652
    %v661 = vmul.f32 %v619, %v653
    %v662 = vmul.f32 %v621, %v654
    %v663 = vmul.f32 %v623, %v655
    %v664 = vpack.c.bf16 %v656, %v656
    %v665 = vpack.c.bf16 %v657, %v657
    %v666 = vpack.c.bf16 %v658, %v658
    %v667 = vpack.c.bf16 %v659, %v659
    %v668 = vpack.c.bf16 %v660, %v660
    %v669 = vpack.c.bf16 %v661, %v661
    %v670 = vpack.c.bf16 %v662, %v662
    %v671 = vpack.c.bf16 %v663, %v663
    %672 = vrot.lane.b32.xlu0 %v175, 64
    %v673 = vpop.permute.xlu0 %672
    %v675 = vsel %vm186, %v664, 0
    %vm677 = vcmask 1043456
    %v679 = vsel %vm677, %v673, 0
    %681 = vmatprep.subr.bf16.mxu0 0
    %682 = vmatpush1.bf16.msra.mxu0 %v679
    %683 = vmatprep.subr.bf16.mxu0 0
    %684 = vmatpush1.bf16.msra.mxu0 0
    %685 = vmatprep.subr.bf16.mxu0 0
    %686 = vmatpush1.bf16.msra.mxu0 0
    %687 = vmatprep.subr.bf16.mxu0 0
    %688 = vmatpush1.bf16.msra.mxu0 0
    %689 = vmatprep.subr.bf16.mxu0 0
    %690 = vmatpush1.bf16.msra.mxu0 0
    %691 = vmatprep.subr.bf16.mxu0 0
    %692 = vmatpush1.bf16.msra.mxu0 0
    %693 = vmatprep.subr.bf16.mxu0 0
    %694 = vmatpush1.bf16.msra.mxu0 0
    %695 = vmatprep.subr.bf16.mxu0 0
    %696 = vmatpush1.bf16.msra.mxu0 0
    %697 = vmatprep.subr.bf16.mxu0 0
    %698 = vmatpush1.bf16.msra.mxu0 0
    %699 = vmatprep.subr.bf16.mxu0 0
    %700 = vmatpush1.bf16.msra.mxu0 0
    %701 = vmatprep.subr.bf16.mxu0 0
    %702 = vmatpush1.bf16.msra.mxu0 0
    %703 = vmatprep.subr.bf16.mxu0 0
    %704 = vmatpush1.bf16.msra.mxu0 0
    %705 = vmatprep.subr.bf16.mxu0 0
    %706 = vmatpush1.bf16.msra.mxu0 0
    %707 = vmatprep.subr.bf16.mxu0 0
    %708 = vmatpush1.bf16.msra.mxu0 0
    %709 = vmatprep.subr.bf16.mxu0 0
    %710 = vmatpush1.bf16.msra.mxu0 0
    %711 = vmatprep.subr.bf16.mxu0 0
    %712 = vmatpush1.bf16.msra.mxu0 0
    %713 = vmatprep.mubr.bf16.mxu0 0
    %714 = vmatmul.mubr.bf16.gmra.mrb[0].mxu0 %v675
    %v715 = vpop.f32.mrb[0].mxu0
    %v716 = vadd.f32 0.0, %v715
    %v717 = vpop.f32.mrb[0].mxu0
    %v718 = vpop.f32.mrb[0].mxu0
    %v719 = vpop.f32.mrb[0].mxu0
    %720 = vdwg.mxu0
    %721 = vrot.lane.b32.xlu0 %v176, 64
    %v722 = vpop.permute.xlu0 %721
    %v724 = vsel %vm186, %v665, 0
    %v727 = vsel %vm677, %v722, 0
    %729 = vmatprep.subr.bf16.mxu0 0
    %730 = vmatpush1.bf16.msra.mxu0 %v727
    %731 = vmatprep.subr.bf16.mxu0 0
    %732 = vmatpush1.bf16.msra.mxu0 0
    %733 = vmatprep.subr.bf16.mxu0 0
    %734 = vmatpush1.bf16.msra.mxu0 0
    %735 = vmatprep.subr.bf16.mxu0 0
    %736 = vmatpush1.bf16.msra.mxu0 0
    %737 = vmatprep.subr.bf16.mxu0 0
    %738 = vmatpush1.bf16.msra.mxu0 0
    %739 = vmatprep.subr.bf16.mxu0 0
    %740 = vmatpush1.bf16.msra.mxu0 0
    %741 = vmatprep.subr.bf16.mxu0 0
    %742 = vmatpush1.bf16.msra.mxu0 0
    %743 = vmatprep.subr.bf16.mxu0 0
    %744 = vmatpush1.bf16.msra.mxu0 0
    %745 = vmatprep.subr.bf16.mxu0 0
    %746 = vmatpush1.bf16.msra.mxu0 0
    %747 = vmatprep.subr.bf16.mxu0 0
    %748 = vmatpush1.bf16.msra.mxu0 0
    %749 = vmatprep.subr.bf16.mxu0 0
    %750 = vmatpush1.bf16.msra.mxu0 0
    %751 = vmatprep.subr.bf16.mxu0 0
    %752 = vmatpush1.bf16.msra.mxu0 0
    %753 = vmatprep.subr.bf16.mxu0 0
    %754 = vmatpush1.bf16.msra.mxu0 0
    %755 = vmatprep.subr.bf16.mxu0 0
    %756 = vmatpush1.bf16.msra.mxu0 0
    %757 = vmatprep.subr.bf16.mxu0 0
    %758 = vmatpush1.bf16.msra.mxu0 0
    %759 = vmatprep.subr.bf16.mxu0 0
    %760 = vmatpush1.bf16.msra.mxu0 0
    %761 = vmatprep.mubr.bf16.mxu0 0
    %762 = vmatmul.mubr.bf16.gmra.mrb[0].mxu0 %v724
    %v763 = vpop.f32.mrb[0].mxu0
    %v764 = vadd.f32 0.0, %v763
    %v765 = vpop.f32.mrb[0].mxu0
    %v766 = vpop.f32.mrb[0].mxu0
    %v767 = vpop.f32.mrb[0].mxu0
    %768 = vdwg.mxu0
    %769 = vrot.lane.b32.xlu0 %v177, 64
    %v770 = vpop.permute.xlu0 %769
    %v772 = vsel %vm186, %v666, 0
    %v775 = vsel %vm677, %v770, 0
    %777 = vmatprep.subr.bf16.mxu0 0
    %778 = vmatpush1.bf16.msra.mxu0 %v775
    %779 = vmatprep.subr.bf16.mxu0 0
    %780 = vmatpush1.bf16.msra.mxu0 0
    %781 = vmatprep.subr.bf16.mxu0 0
    %782 = vmatpush1.bf16.msra.mxu0 0
    %783 = vmatprep.subr.bf16.mxu0 0
    %784 = vmatpush1.bf16.msra.mxu0 0
    %785 = vmatprep.subr.bf16.mxu0 0
    %786 = vmatpush1.bf16.msra.mxu0 0
    %787 = vmatprep.subr.bf16.mxu0 0
    %788 = vmatpush1.bf16.msra.mxu0 0
    %789 = vmatprep.subr.bf16.mxu0 0
    %790 = vmatpush1.bf16.msra.mxu0 0
    %791 = vmatprep.subr.bf16.mxu0 0
    %792 = vmatpush1.bf16.msra.mxu0 0
    %793 = vmatprep.subr.bf16.mxu0 0
    %794 = vmatpush1.bf16.msra.mxu0 0
    %795 = vmatprep.subr.bf16.mxu0 0
    %796 = vmatpush1.bf16.msra.mxu0 0
    %797 = vmatprep.subr.bf16.mxu0 0
    %798 = vmatpush1.bf16.msra.mxu0 0
    %799 = vmatprep.subr.bf16.mxu0 0
    %800 = vmatpush1.bf16.msra.mxu0 0
    %801 = vmatprep.subr.bf16.mxu0 0
    %802 = vmatpush1.bf16.msra.mxu0 0
    %803 = vmatprep.subr.bf16.mxu0 0
    %804 = vmatpush1.bf16.msra.mxu0 0
    %805 = vmatprep.subr.bf16.mxu0 0
    %806 = vmatpush1.bf16.msra.mxu0 0
    %807 = vmatprep.subr.bf16.mxu0 0
    %808 = vmatpush1.bf16.msra.mxu0 0
    %809 = vmatprep.mubr.bf16.mxu0 0
    %810 = vmatmul.mubr.bf16.gmra.mrb[0].mxu0 %v772
    %v811 = vpop.f32.mrb[0].mxu0
    %v812 = vadd.f32 0.0, %v811
    %v813 = vpop.f32.mrb[0].mxu0
    %v814 = vpop.f32.mrb[0].mxu0
    %v815 = vpop.f32.mrb[0].mxu0
    %816 = vdwg.mxu0
    %817 = vrot.lane.b32.xlu0 %v178, 64
    %v818 = vpop.permute.xlu0 %817
    %v820 = vsel %vm186, %v667, 0
    %v823 = vsel %vm677, %v818, 0
    %825 = vmatprep.subr.bf16.mxu0 0
    %826 = vmatpush1.bf16.msra.mxu0 %v823
    %827 = vmatprep.subr.bf16.mxu0 0
    %828 = vmatpush1.bf16.msra.mxu0 0
    %829 = vmatprep.subr.bf16.mxu0 0
    %830 = vmatpush1.bf16.msra.mxu0 0
    %831 = vmatprep.subr.bf16.mxu0 0
    %832 = vmatpush1.bf16.msra.mxu0 0
    %833 = vmatprep.subr.bf16.mxu0 0
    %834 = vmatpush1.bf16.msra.mxu0 0
    %835 = vmatprep.subr.bf16.mxu0 0
    %836 = vmatpush1.bf16.msra.mxu0 0
    %837 = vmatprep.subr.bf16.mxu0 0
    %838 = vmatpush1.bf16.msra.mxu0 0
    %839 = vmatprep.subr.bf16.mxu0 0
    %840 = vmatpush1.bf16.msra.mxu0 0
    %841 = vmatprep.subr.bf16.mxu0 0
    %842 = vmatpush1.bf16.msra.mxu0 0
    %843 = vmatprep.subr.bf16.mxu0 0
    %844 = vmatpush1.bf16.msra.mxu0 0
    %845 = vmatprep.subr.bf16.mxu0 0
    %846 = vmatpush1.bf16.msra.mxu0 0
    %847 = vmatprep.subr.bf16.mxu0 0
    %848 = vmatpush1.bf16.msra.mxu0 0
    %849 = vmatprep.subr.bf16.mxu0 0
    %850 = vmatpush1.bf16.msra.mxu0 0
    %851 = vmatprep.subr.bf16.mxu0 0
    %852 = vmatpush1.bf16.msra.mxu0 0
    %853 = vmatprep.subr.bf16.mxu0 0
    %854 = vmatpush1.bf16.msra.mxu0 0
    %855 = vmatprep.subr.bf16.mxu0 0
    %856 = vmatpush1.bf16.msra.mxu0 0
    %857 = vmatprep.mubr.bf16.mxu0 0
    %858 = vmatmul.mubr.bf16.gmra.mrb[0].mxu0 %v820
    %v859 = vpop.f32.mrb[0].mxu0
    %v860 = vadd.f32 0.0, %v859
    %v861 = vpop.f32.mrb[0].mxu0
    %v862 = vpop.f32.mrb[0].mxu0
    %v863 = vpop.f32.mrb[0].mxu0
    %864 = vdwg.mxu0
    %865 = vrot.lane.b32.xlu0 %v179, 64
    %v866 = vpop.permute.xlu0 %865
    %v868 = vsel %vm186, %v668, 0
    %v871 = vsel %vm677, %v866, 0
    %873 = vmatprep.subr.bf16.mxu0 0
    %874 = vmatpush1.bf16.msra.mxu0 %v871
    %875 = vmatprep.subr.bf16.mxu0 0
    %876 = vmatpush1.bf16.msra.mxu0 0
    %877 = vmatprep.subr.bf16.mxu0 0
    %878 = vmatpush1.bf16.msra.mxu0 0
    %879 = vmatprep.subr.bf16.mxu0 0
    %880 = vmatpush1.bf16.msra.mxu0 0
    %881 = vmatprep.subr.bf16.mxu0 0
    %882 = vmatpush1.bf16.msra.mxu0 0
    %883 = vmatprep.subr.bf16.mxu0 0
    %884 = vmatpush1.bf16.msra.mxu0 0
    %885 = vmatprep.subr.bf16.mxu0 0
    %886 = vmatpush1.bf16.msra.mxu0 0
    %887 = vmatprep.subr.bf16.mxu0 0
    %888 = vmatpush1.bf16.msra.mxu0 0
    %889 = vmatprep.subr.bf16.mxu0 0
    %890 = vmatpush1.bf16.msra.mxu0 0
    %891 = vmatprep.subr.bf16.mxu0 0
    %892 = vmatpush1.bf16.msra.mxu0 0
    %893 = vmatprep.subr.bf16.mxu0 0
    %894 = vmatpush1.bf16.msra.mxu0 0
    %895 = vmatprep.subr.bf16.mxu0 0
    %896 = vmatpush1.bf16.msra.mxu0 0
    %897 = vmatprep.subr.bf16.mxu0 0
    %898 = vmatpush1.bf16.msra.mxu0 0
    %899 = vmatprep.subr.bf16.mxu0 0
    %900 = vmatpush1.bf16.msra.mxu0 0
    %901 = vmatprep.subr.bf16.mxu0 0
    %902 = vmatpush1.bf16.msra.mxu0 0
    %903 = vmatprep.subr.bf16.mxu0 0
    %904 = vmatpush1.bf16.msra.mxu0 0
    %905 = vmatprep.mubr.bf16.mxu0 0
    %906 = vmatmul.mubr.bf16.gmra.mrb[0].mxu0 %v868
    %v907 = vpop.f32.mrb[0].mxu0
    %v908 = vadd.f32 0.0, %v907
    %v909 = vpop.f32.mrb[0].mxu0
    %v910 = vpop.f32.mrb[0].mxu0
    %v911 = vpop.f32.mrb[0].mxu0
    %912 = vdwg.mxu0
    %913 = vrot.lane.b32.xlu0 %v180, 64
    %v914 = vpop.permute.xlu0 %913
    %v916 = vsel %vm186, %v669, 0
    %v919 = vsel %vm677, %v914, 0
    %921 = vmatprep.subr.bf16.mxu0 0
    %922 = vmatpush1.bf16.msra.mxu0 %v919
    %923 = vmatprep.subr.bf16.mxu0 0
    %924 = vmatpush1.bf16.msra.mxu0 0
    %925 = vmatprep.subr.bf16.mxu0 0
    %926 = vmatpush1.bf16.msra.mxu0 0
    %927 = vmatprep.subr.bf16.mxu0 0
    %928 = vmatpush1.bf16.msra.mxu0 0
    %929 = vmatprep.subr.bf16.mxu0 0
    %930 = vmatpush1.bf16.msra.mxu0 0
    %931 = vmatprep.subr.bf16.mxu0 0
    %932 = vmatpush1.bf16.msra.mxu0 0
    %933 = vmatprep.subr.bf16.mxu0 0
    %934 = vmatpush1.bf16.msra.mxu0 0
    %935 = vmatprep.subr.bf16.mxu0 0
    %936 = vmatpush1.bf16.msra.mxu0 0
    %937 = vmatprep.subr.bf16.mxu0 0
    %938 = vmatpush1.bf16.msra.mxu0 0
    %939 = vmatprep.subr.bf16.mxu0 0
    %940 = vmatpush1.bf16.msra.mxu0 0
    %941 = vmatprep.subr.bf16.mxu0 0
    %942 = vmatpush1.bf16.msra.mxu0 0
    %943 = vmatprep.subr.bf16.mxu0 0
    %944 = vmatpush1.bf16.msra.mxu0 0
    %945 = vmatprep.subr.bf16.mxu0 0
    %946 = vmatpush1.bf16.msra.mxu0 0
    %947 = vmatprep.subr.bf16.mxu0 0
    %948 = vmatpush1.bf16.msra.mxu0 0
    %949 = vmatprep.subr.bf16.mxu0 0
    %950 = vmatpush1.bf16.msra.mxu0 0
    %951 = vmatprep.subr.bf16.mxu0 0
    %952 = vmatpush1.bf16.msra.mxu0 0
    %953 = vmatprep.mubr.bf16.mxu0 0
    %954 = vmatmul.mubr.bf16.gmra.mrb[0].mxu0 %v916
    %v955 = vpop.f32.mrb[0].mxu0
    %v956 = vadd.f32 0.0, %v955
    %v957 = vpop.f32.mrb[0].mxu0
    %v958 = vpop.f32.mrb[0].mxu0
    %v959 = vpop.f32.mrb[0].mxu0
    %960 = vdwg.mxu0
    %961 = vrot.lane.b32.xlu0 %v181, 64
    %v962 = vpop.permute.xlu0 %961
    %v964 = vsel %vm186, %v670, 0
    %v967 = vsel %vm677, %v962, 0
    %969 = vmatprep.subr.bf16.mxu0 0
    %970 = vmatpush1.bf16.msra.mxu0 %v967
    %971 = vmatprep.subr.bf16.mxu0 0
    %972 = vmatpush1.bf16.msra.mxu0 0
    %973 = vmatprep.subr.bf16.mxu0 0
    %974 = vmatpush1.bf16.msra.mxu0 0
    %975 = vmatprep.subr.bf16.mxu0 0
    %976 = vmatpush1.bf16.msra.mxu0 0
    %977 = vmatprep.subr.bf16.mxu0 0
    %978 = vmatpush1.bf16.msra.mxu0 0
    %979 = vmatprep.subr.bf16.mxu0 0
    %980 = vmatpush1.bf16.msra.mxu0 0
    %981 = vmatprep.subr.bf16.mxu0 0
    %982 = vmatpush1.bf16.msra.mxu0 0
    %983 = vmatprep.subr.bf16.mxu0 0
    %984 = vmatpush1.bf16.msra.mxu0 0
    %985 = vmatprep.subr.bf16.mxu0 0
    %986 = vmatpush1.bf16.msra.mxu0 0
    %987 = vmatprep.subr.bf16.mxu0 0
    %988 = vmatpush1.bf16.msra.mxu0 0
    %989 = vmatprep.subr.bf16.mxu0 0
    %990 = vmatpush1.bf16.msra.mxu0 0
    %991 = vmatprep.subr.bf16.mxu0 0
    %992 = vmatpush1.bf16.msra.mxu0 0
    %993 = vmatprep.subr.bf16.mxu0 0
    %994 = vmatpush1.bf16.msra.mxu0 0
    %995 = vmatprep.subr.bf16.mxu0 0
    %996 = vmatpush1.bf16.msra.mxu0 0
    %997 = vmatprep.subr.bf16.mxu0 0
    %998 = vmatpush1.bf16.msra.mxu0 0
    %999 = vmatprep.subr.bf16.mxu0 0
    %1000 = vmatpush1.bf16.msra.mxu0 0
    %1001 = vmatprep.mubr.bf16.mxu0 0
    %1002 = vmatmul.mubr.bf16.gmra.mrb[0].mxu0 %v964
    %v1003 = vpop.f32.mrb[0].mxu0
    %v1004 = vadd.f32 0.0, %v1003
    %v1005 = vpop.f32.mrb[0].mxu0
    %v1006 = vpop.f32.mrb[0].mxu0
    %v1007 = vpop.f32.mrb[0].mxu0
    %1008 = vdwg.mxu0
    %1009 = vrot.lane.b32.xlu0 %v182, 64
    %v1010 = vpop.permute.xlu0 %1009
    %v1012 = vsel %vm186, %v671, 0
    %v1015 = vsel %vm677, %v1010, 0
    %1017 = vmatprep.subr.bf16.mxu0 0
    %1018 = vmatpush1.bf16.msra.mxu0 %v1015
    %1019 = vmatprep.subr.bf16.mxu0 0
    %1020 = vmatpush1.bf16.msra.mxu0 0
    %1021 = vmatprep.subr.bf16.mxu0 0
    %1022 = vmatpush1.bf16.msra.mxu0 0
    %1023 = vmatprep.subr.bf16.mxu0 0
    %1024 = vmatpush1.bf16.msra.mxu0 0
    %1025 = vmatprep.subr.bf16.mxu0 0
    %1026 = vmatpush1.bf16.msra.mxu0 0
    %1027 = vmatprep.subr.bf16.mxu0 0
    %1028 = vmatpush1.bf16.msra.mxu0 0
    %1029 = vmatprep.subr.bf16.mxu0 0
    %1030 = vmatpush1.bf16.msra.mxu0 0
    %1031 = vmatprep.subr.bf16.mxu0 0
    %1032 = vmatpush1.bf16.msra.mxu0 0
    %1033 = vmatprep.subr.bf16.mxu0 0
    %1034 = vmatpush1.bf16.msra.mxu0 0
    %1035 = vmatprep.subr.bf16.mxu0 0
    %1036 = vmatpush1.bf16.msra.mxu0 0
    %1037 = vmatprep.subr.bf16.mxu0 0
    %1038 = vmatpush1.bf16.msra.mxu0 0
    %1039 = vmatprep.subr.bf16.mxu0 0
    %1040 = vmatpush1.bf16.msra.mxu0 0
    %1041 = vmatprep.subr.bf16.mxu0 0
    %1042 = vmatpush1.bf16.msra.mxu0 0
    %1043 = vmatprep.subr.bf16.mxu0 0
    %1044 = vmatpush1.bf16.msra.mxu0 0
    %1045 = vmatprep.subr.bf16.mxu0 0
    %1046 = vmatpush1.bf16.msra.mxu0 0
    %1047 = vmatprep.subr.bf16.mxu0 0
    %1048 = vmatpush1.bf16.msra.mxu0 0
    %1049 = vmatprep.mubr.bf16.mxu0 0
    %1050 = vmatmul.mubr.bf16.gmra.mrb[0].mxu0 %v1012
    %v1051 = vpop.f32.mrb[0].mxu0
    %v1052 = vadd.f32 0.0, %v1051
    %v1053 = vpop.f32.mrb[0].mxu0
    %v1054 = vpop.f32.mrb[0].mxu0
    %v1055 = vpop.f32.mrb[0].mxu0
    %1056 = vdwg.mxu0
    %1058 = vrot.lane.b32.xlu0 %v764, 8
    %v1059 = vpop.permute.xlu0 %1058
    %1062 = vrot.lane.b32.xlu0 %v812, 16
    %v1063 = vpop.permute.xlu0 %1062
    %1066 = vrot.lane.b32.xlu0 %v860, 24
    %v1067 = vpop.permute.xlu0 %1066
    %v1069 = vsel %vm186, %v716, %v1059
    %vm1070 = vcmask 130048
    %v1071 = vsel %vm1070, %v1069, %v1063
    %vm1072 = vcmask 195584
    %v1073 = vsel %vm1072, %v1071, %v1067
    %1075 = vrot.lane.b32.xlu0 %v956, 8
    %v1076 = vpop.permute.xlu0 %1075
    %1079 = vrot.lane.b32.xlu0 %v1004, 16
    %v1080 = vpop.permute.xlu0 %1079
    %1083 = vrot.lane.b32.xlu0 %v1052, 24
    %v1084 = vpop.permute.xlu0 %1083
    %v1086 = vsel %vm186, %v908, %v1076
    %v1087 = vsel %vm1070, %v1086, %v1080
    %v1088 = vsel %vm1072, %v1087, %v1084
    %v1089 = vpack.c.bf16 %v1088, %v1073
    %v1090 = vld [vmem:[#allocation8] sm:$0xf]
    %v1091 = vld [vmem:[#allocation8 + $0x4] sm:$0xf]
    %v1092 = vld [vmem:[#allocation8 + $0x8] sm:$0xf]
    %v1093 = vld [vmem:[#allocation8 + $0xc] sm:$0xf]
    %v1094 = vld [vmem:[%s5] sm:$0x1]
    %v1096 = vlaneseq
    %v1097 = vshrl.u32 %v1096, 7
    %v1098 = vsub.s32 0, %v1097
    %v1099 = vrot.slane %v1094, %v1098
    %v1105 = vunpack.c.l.b16 %v1090
    %v1106 = vunpack.c.l.b16 %v1091
    %v1107 = vunpack.c.l.b16 %v1092
    %v1108 = vunpack.c.l.b16 %v1093
    %v1109 = vpack.c.b16 %v1106, %v1105
    %v1110 = vpack.c.b16 %v1108, %v1107
    %v1114 = vsel %vm110, %v1089, 0
    %1116 = vmatprep.subr.bf16.mxu0 0
    %1117 = vmatpush1.bf16.msra.mxu0 %v1109
    %1118 = vmatprep.subr.bf16.mxu0 0
    %1119 = vmatpush1.bf16.msra.mxu0 %v1110
    %1120 = vmatprep.subr.bf16.mxu0 0
    %1121 = vmatpush1.bf16.msra.mxu0 0
    %1122 = vmatprep.subr.bf16.mxu0 0
    %1123 = vmatpush1.bf16.msra.mxu0 0
    %1124 = vmatprep.subr.bf16.mxu0 0
    %1125 = vmatpush1.bf16.msra.mxu0 0
    %1126 = vmatprep.subr.bf16.mxu0 0
    %1127 = vmatpush1.bf16.msra.mxu0 0
    %1128 = vmatprep.subr.bf16.mxu0 0
    %1129 = vmatpush1.bf16.msra.mxu0 0
    %1130 = vmatprep.subr.bf16.mxu0 0
    %1131 = vmatpush1.bf16.msra.mxu0 0
    %1132 = vmatprep.subr.bf16.mxu0 0
    %1133 = vmatpush1.bf16.msra.mxu0 0
    %1134 = vmatprep.subr.bf16.mxu0 0
    %1135 = vmatpush1.bf16.msra.mxu0 0
    %1136 = vmatprep.subr.bf16.mxu0 0
    %1137 = vmatpush1.bf16.msra.mxu0 0
    %1138 = vmatprep.subr.bf16.mxu0 0
    %1139 = vmatpush1.bf16.msra.mxu0 0
    %1140 = vmatprep.subr.bf16.mxu0 0
    %1141 = vmatpush1.bf16.msra.mxu0 0
    %1142 = vmatprep.subr.bf16.mxu0 0
    %1143 = vmatpush1.bf16.msra.mxu0 0
    %1144 = vmatprep.subr.bf16.mxu0 0
    %1145 = vmatpush1.bf16.msra.mxu0 0
    %1146 = vmatprep.subr.bf16.mxu0 0
    %1147 = vmatpush1.bf16.msra.mxu0 0
    %1148 = vmatprep.mubr.bf16.mxu0 0
    %1149 = vmatmul.mubr.bf16.gmra.mrb[0].mxu0 %v1114
    %v1150 = vpop.f32.mrb[0].mxu0
    %v1151 = vadd.f32 %v1099, %v1150
    %v1152 = vpop.f32.mrb[0].mxu0
    %v1153 = vpop.f32.mrb[0].mxu0
    %v1154 = vadd.f32 %v1099, %v1153
    %v1155 = vpop.f32.mrb[0].mxu0
    %1156 = vdwg.mxu0
    %1157 = vst.msk [vmem:[#allocation10] sm:$0xff] %vm110, %v1151
    %1158 = vst.msk [vmem:[#allocation10 + $0x8] sm:$0xff] %vm110, %v1154
    // Predicated region
    $region42: #{tpu_custom_call.1} parent=1 // pred_check
      _
    $region43: #{tpu_custom_call.1} parent=1 // pred_check_branch
      %1160 = sbr.rel (0) target = $region45
    $region44: #{tpu_custom_call.1} parent=1 // pred_region
      %s1162 = ssub.s32 256, 256
      %1163 = vsyncadd [#allocation4], %s1162
      %s1164 = sshll.u32 [#allocation10], 4
      %s1165 = int_to_ptr.vmem [resolvable:$true] %s1164
      %1170 = dma.vmem_to_hbm [thread:$0]  %s1165, 256, %s6, [#allocation4], 128, 128, 8
    $region45: #{tpu_custom_call.1} parent=1 // pred_fallthru
      _
    // Predicated region
    $region46: #{tpu_custom_call.1} parent=1 // pred_check
      _
    $region47: #{tpu_custom_call.1} parent=1 // pred_check_branch
      %1172 = sbr.rel (0) target = $region49
    $region48: #{tpu_custom_call.1} parent=1 // pred_region
      %1173 = dma.done [#allocation4], 256
    $region49: #{tpu_custom_call.1} parent=1 // pred_fallthru
      _
    %1174 = vsyncpa [#allocation3], 1
    %1175 = vsyncpa [#allocation6], 1
    %1176 = vsyncpa [#allocation9], 1
    %1177 = vsyncpa [#allocation4], 1

</llo_original>
